<compile_context>
chip_gen: v5e
topology: v5e:2x2
jax: 0.10.0
libtpu: 0.0.40
codegen_flags: <defaults>
</compile_context>

<pallas_src>
import numpy as np
import jax
import jax.numpy as jnp
from jax import lax
from jax.experimental import pallas as pl
from jax.experimental.pallas import tpu as pltpu

_SENTINEL = 1e30  # ignored / padded pixels carry error == -_SENTINEL after the sort


def _pick_chunk():
    """Lane tile T: 256 on v6e/v7x (256-wide MXU), 128 on v5e/v5p/v4/unknown."""
    try:
        kind = jax.devices()[0].device_kind.lower()
    except Exception:
        return 128
    return 256 if ("v6" in kind or "v7" in kind) else 128


def _lovasz_kernel(gts_ref, tri_ref, ls_ref, err_ref, fg_ref, out_ref, carry_ref):
    """One streaming step of the per-image Lovasz-sigmoid loss.

    gts_ref  : (nB,)    f32 SMEM   total foreground count per image
    tri_ref  : (T, T)   bf16       upper-triangular (inclusive) ones, grid-constant
    ls_ref   : (R, R)   bf16       strict-lower-triangular ones, grid-constant
    err_ref  : (R, T)   f32        sorted |fg - p|; -1e30 at ignored / padded slots
    fg_ref   : (R, T)   bf16       fg co-sorted with the errors (0/1 values)
    out_ref  : (1, T)   f32        per-image lane-partial loss (accumulated over steps)
    carry_ref: (1, 1)   f32 VMEM   running foreground count from previous steps
    """
    b = pl.program_id(0)
    s = pl.program_id(1)
    f32 = jnp.float32

    @pl.when(s == 0)
    def _():
        out_ref[...] = jnp.zeros_like(out_ref)
        carry_ref[...] = jnp.zeros_like(carry_ref)

    e = err_ref[...]                                             # (R, T) f32
    g_bf = fg_ref[...]                                           # (R, T) bf16
    R, T = e.shape
    g = g_bf.astype(f32)

    # within-chunk inclusive cumsum along the lane axis (bf16 x bf16 -> f32 MXU)
    part = jnp.dot(g_bf, tri_ref[...], preferred_element_type=f32)        # (R, T)

    # per-chunk totals + within-step exclusive prefix over chunk rows.
    # chunk totals are <= T <= 256, hence exact in bf16; accumulation is f32.
    chunk_tot = jnp.sum(g, axis=1, keepdims=True)                          # (R, 1)
    excl = jnp.dot(ls_ref[...], chunk_tot.astype(jnp.bfloat16),
                   preferred_element_type=f32)                             # (R, 1)

    carry = carry_ref[...]                                                 # (1, 1)
    cum_g = part + excl + carry                                            # (R, T)

    gts = gts_ref[b]                                                       # scalar f32

    row = lax.broadcasted_iota(jnp.int32, (R, T), 0)
    col = lax.broadcasted_iota(jnp.int32, (R, T), 1)
    pos = s * (R * T) + row * T + col                                      # global index j
    cnt = (pos + 1).astype(f32)                                            # j + 1 (exact < 2^24)

    inter = gts - cum_g
    union = gts + cnt - cum_g                                              # >= 1 always

    # grad[j] = jaccard[j] - jaccard[j-1], folded into a single divide:
    #   j == 0            -> 1 / union
    #   g[j] == 1         -> 1 / union
    #   g[j] == 0, j > 0  -> inter / (union * (union - 1))   (union - 1 >= 1 here)
    sel = (pos == 0) | (g > 0.5)
    num = jnp.where(sel, 1.0, inter)
    den = jnp.where(sel, union, union * (union - 1.0))
    grad = num / den

    # ignored / padded slots carry a negative sentinel error -> zero contribution
    e_valid = jnp.where(e >= 0.0, e, 0.0)
    out_ref[...] += jnp.sum(e_valid * grad, axis=0, keepdims=True)         # (1, T)

    # advance the running foreground-count carry into the next step
    carry_ref[...] = carry + jnp.sum(chunk_tot, axis=0, keepdims=True)


def lovasz_sigmoid_pallas(outputs, targets, *, per_image=True, ignore=255):
    """outputs: probabilities, NCHW float; targets: NCHW labels {0, 1, ignore}."""
    outputs = outputs.astype(jnp.float32)
    B = outputs.shape[0]

    if per_image:
        probs = outputs.reshape(B, -1)
        labs = targets.reshape(B, -1)
    else:
        probs = outputs.reshape(1, -1)
        labs = targets.reshape(1, -1)
    nB, P = probs.shape

    valid = labs != ignore
    fg = jnp.where(valid, (labs == 1).astype(jnp.float32), 0.0)
    errors = jnp.abs(fg - probs)
    gts = jnp.sum(fg, axis=1)                                   # (nB,) foreground totals

    # Descending co-sort of (errors, fg); ignored pixels get a huge ascending key
    # so they land at the tail with err == -1e30 (kernel validity test: err >= 0).
    # TODO(synk): the sort has no Pallas TPU primitive; done with lax.sort in glue.
    neg_key = jnp.where(valid, -errors, jnp.float32(_SENTINEL))
    neg_sorted, fg_sorted = lax.sort((neg_key, fg), dimension=-1, num_keys=1)
    err_sorted = -neg_sorted

    # NOTE: prefix counts are carried in f32 -> exact only up to 2^24 pixels/image.
    T = _pick_chunk()
    rows_max = 512 if T == 128 else 256          # ~384 KiB of err+fg per grid step
    nC_raw = pl.cdiv(P, T)
    ROWS = min(rows_max, ((nC_raw + 7) // 8) * 8)
    nsteps = pl.cdiv(nC_raw, ROWS)
    nC = nsteps * ROWS
    P_pad = nC * T
    if P_pad != P:
        pad = P_pad - P
        err_sorted = jnp.pad(err_sorted, ((0, 0), (0, pad)), constant_values=-_SENTINEL)
        fg_sorted = jnp.pad(fg_sorted, ((0, 0), (0, pad)), constant_values=0.0)

    err3 = err_sorted.reshape(nB, nC, T)                        # f32, 4 B/pixel
    fg3 = fg_sorted.astype(jnp.bfloat16).reshape(nB, nC, T)     # bf16, 2 B/pixel

    idx_t = jnp.arange(T, dtype=jnp.int32)
    tri = (idx_t[:, None] <= idx_t[None, :]).astype(jnp.bfloat16)   # (T,T) upper-incl
    idx_r = jnp.arange(ROWS, dtype=jnp.int32)
    ls = (idx_r[None, :] < idx_r[:, None]).astype(jnp.bfloat16)     # (R,R) strict lower

    out = pl.pallas_call(
        _lovasz_kernel,
        out_shape=jax.ShapeDtypeStruct((nB, 1, T), jnp.float32),
        grid=(nB, nsteps),
        in_specs=[
            pl.BlockSpec(memory_space=pltpu.MemorySpace.SMEM),          # gts (nB,)
            pl.BlockSpec((T, T), lambda b, s: (0, 0)),                  # tri (grid-const)
            pl.BlockSpec((ROWS, ROWS), lambda b, s: (0, 0)),            # ls  (grid-const)
            pl.BlockSpec((None, ROWS, T), lambda b, s: (b, s, 0)),      # sorted errors
            pl.BlockSpec((None, ROWS, T), lambda b, s: (b, s, 0)),      # sorted fg
        ],
        out_specs=pl.BlockSpec((None, 1, T), lambda b, s: (b, 0, 0)),
        scratch_shapes=[pltpu.VMEM((1, 1), jnp.float32)],
        compiler_params=pltpu.CompilerParams(
            dimension_semantics=("parallel", "arbitrary"),
        ),
    )(gts, tri, ls, err3, fg3)

    per_image_loss = jnp.sum(out[:, 0, :], axis=-1)
    # `mean()` helper in the reference = plain arithmetic mean over images.
    return jnp.mean(per_image_loss)


class LovaszLossSigmoid:
    """JAX/Pallas port of the PyTorch LovaszLossSigmoid module (no params)."""

    def __init__(self, ignore_index=255, per_image=True):
        self.ignore_index = ignore_index
        self.per_image = per_image

    def __call__(self, outputs, targets):
        return lovasz_sigmoid_pallas(outputs, targets,
                                     per_image=self.per_image,
                                     ignore=self.ignore_index)


def _lovasz_sigmoid_ref(outputs, targets, per_image=True, ignore=255):
    """Plain numpy transliteration of the PyTorch reference (self-test only)."""
    outputs = np.asarray(outputs, np.float64)
    targets = np.asarray(targets)

    def flat_loss(p, t):
        keep = t != ignore
        p, t = p[keep], t[keep]
        if p.size == 0:
            return 0.0
        fgv = (t == 1).astype(np.float64)
        err = np.abs(fgv - p)
        order = np.argsort(-err, kind="stable")
        es, gs = err[order], fgv[order]
        gtot = gs.sum()
        inter = gtot - np.cumsum(gs)
        union = gtot + np.cumsum(1.0 - gs)
        jac = 1.0 - inter / union
        if jac.size > 1:
            jac[1:] = jac[1:] - jac[:-1]
        return float(np.dot(es, jac))

    if per_image:
        losses = [flat_loss(outputs[b].reshape(-1), targets[b].reshape(-1))
                  for b in range(outputs.shape[0])]
        return float(np.mean(losses))
    return flat_loss(outputs.reshape(-1), targets.reshape(-1))


if __name__ == "__main__":
    key = jax.random.PRNGKey(0)
    k1, k2, k3 = jax.random.split(key, 3)

    B, C, H, W = 2, 1, 16, 16
    logits = jax.random.normal(k1, (B, C, H, W), jnp.float32)
    outputs = jax.nn.sigmoid(logits)                     # probabilities in (0,1)

    targets = (jax.random.uniform(k2, (B, C, H, W)) > 0.5).astype(jnp.int32)
    ignore_mask = jax.random.uniform(k3, (B, C, H, W)) < 0.1
    targets = jnp.where(ignore_mask, 255, targets)       # sprinkle ignore_index

    loss_fn = LovaszLossSigmoid(ignore_index=255, per_image=True)
    loss = loss_fn(outputs, targets)
    jax.block_until_ready(loss)
    assert bool(jnp.isfinite(loss)), "loss is not finite"

    ref = _lovasz_sigmoid_ref(np.asarray(outputs), np.asarray(targets),
                              per_image=True, ignore=255)
    assert abs(float(loss) - ref) < 1e-4, (float(loss), ref)
    print("KERNEL_OK")
</pallas_src>

<mosaic_0001>
module attributes {stable_mosaic.version = 11 : i64} {
  func.func @_lovasz_kernel(%arg0: i32, %arg1: i32, %arg2: memref<2xf32, #tpu.memory_space<smem>>, %arg3: memref<128x128xbf16, #tpu.memory_space<vmem>>, %arg4: memref<8x8xbf16, #tpu.memory_space<vmem>>, %arg5: memref<1x8x128xf32, #tpu.memory_space<vmem>>, %arg6: memref<1x8x128xbf16, #tpu.memory_space<vmem>>, %arg7: memref<1x1x128xf32, #tpu.memory_space<vmem>>, %arg8: memref<1x1xf32, #tpu.memory_space<vmem>>) attributes {dimension_semantics = [#tpu.dimension_semantics<parallel>, #tpu.dimension_semantics<arbitrary>], iteration_bounds = array<i64: 2, 1>, scalar_prefetch = 0 : i64, scratch_operands = 1 : i64, tpu.core_type = #tpu.core_type<tc>, window_params = [{transform_indices = @transform_0, window_bounds = array<i64: 2>}, {pipeline_mode = #tpu.pipeline_mode<synchronous>, transform_indices = @transform_1, window_bounds = array<i64: 128, 128>}, {pipeline_mode = #tpu.pipeline_mode<synchronous>, transform_indices = @transform_2, window_bounds = array<i64: 8, 8>}, {transform_indices = @transform_3, window_bounds = array<i64: 1, 8, 128>}, {transform_indices = @transform_4, window_bounds = array<i64: 1, 8, 128>}, {transform_indices = @transform_5, window_bounds = array<i64: 1, 1, 128>}]} {
    %c0_i32 = arith.constant 0 : i32
    %0 = arith.cmpi eq, %arg1, %c0_i32 : i32
    %1 = arith.extui %0 : i1 to i32
    %c0_i32_0 = arith.constant 0 : i32
    %2 = arith.cmpi ne, %1, %c0_i32_0 : i32
    scf.if %2 {
      %cst_30 = arith.constant 0.000000e+00 : f32
      %67 = vector.broadcast %cst_30 : f32 to vector<1x128xf32>
      %c0_31 = arith.constant 0 : index
      %c0_32 = arith.constant 0 : index
      %c0_33 = arith.constant 0 : index
      %68 = vector.load %arg7[%c0_31, %c0_32, %c0_33] : memref<1x1x128xf32, #tpu.memory_space<vmem>>, vector<1x1x128xf32>
      %69 = vector.shape_cast %68 : vector<1x1x128xf32> to vector<1x128xf32>
      %70 = vector.shape_cast %67 : vector<1x128xf32> to vector<1x1x128xf32>
      tpu.vector_store %arg7[%c0_31, %c0_32, %c0_33], %70 {strides = array<i32>} : memref<1x1x128xf32, #tpu.memory_space<vmem>>, vector<1x1x128xf32>,
      %cst_34 = arith.constant 0.000000e+00 : f32
      %71 = vector.broadcast %cst_34 : f32 to vector<1x1xf32>
      %c0_35 = arith.constant 0 : index
      %c0_36 = arith.constant 0 : index
      %72 = vector.load %arg8[%c0_35, %c0_36] : memref<1x1xf32, #tpu.memory_space<vmem>>, vector<1x1xf32>
      tpu.vector_store %arg8[%c0_35, %c0_36], %71 {strides = array<i32>} : memref<1x1xf32, #tpu.memory_space<vmem>>, vector<1x1xf32>,
    } else {
    }
    %c0 = arith.constant 0 : index
    %c0_1 = arith.constant 0 : index
    %c0_2 = arith.constant 0 : index
    %3 = vector.load %arg5[%c0, %c0_1, %c0_2] : memref<1x8x128xf32, #tpu.memory_space<vmem>>, vector<1x8x128xf32>
    %4 = vector.shape_cast %3 : vector<1x8x128xf32> to vector<8x128xf32>
    %c0_3 = arith.constant 0 : index
    %c0_4 = arith.constant 0 : index
    %c0_5 = arith.constant 0 : index
    %5 = vector.load %arg6[%c0_3, %c0_4, %c0_5] : memref<1x8x128xbf16, #tpu.memory_space<vmem>>, vector<1x8x128xbf16>
    %6 = vector.shape_cast %5 : vector<1x8x128xbf16> to vector<8x128xbf16>
    %7 = arith.extf %6 : vector<8x128xbf16> to vector<8x128xf32>
    %c0_6 = arith.constant 0 : index
    %c0_7 = arith.constant 0 : index
    %8 = vector.load %arg3[%c0_6, %c0_7] : memref<128x128xbf16, #tpu.memory_space<vmem>>, vector<128x128xbf16>
    %cst = arith.constant dense<0.000000e+00> : vector<8x128xf32>
    %9 = tpu.matmul %6, %8, %cst {dimension_numbers = #tpu.dot_dimension_numbers<[1], [0], [0], [1], [0, 0, 1, 1], [], []>} : vector<8x128xbf16>, vector<128x128xbf16>, vector<8x128xf32> -> vector<8x128xf32>
    %cst_8 = arith.constant dense<0.000000e+00> : vector<8xf32>
    %10 = vector.multi_reduction <add>, %7, %cst_8 [1] : vector<8x128xf32> to vector<8xf32>
    %11 = vector.shape_cast %10 : vector<8xf32> to vector<8x1xf32>
    %c0_9 = arith.constant 0 : index
    %c0_10 = arith.constant 0 : index
    %12 = vector.load %arg4[%c0_9, %c0_10] : memref<8x8xbf16, #tpu.memory_space<vmem>>, vector<8x8xbf16>
    %13 = arith.truncf %11 : vector<8x1xf32> to vector<8x1xbf16>
    %cst_11 = arith.constant dense<0.000000e+00> : vector<8x1xf32>
    %14 = tpu.matmul %12, %13, %cst_11 {dimension_numbers = #tpu.dot_dimension_numbers<[1], [0], [0], [1], [0, 0, 1, 1], [], []>} : vector<8x8xbf16>, vector<8x1xbf16>, vector<8x1xf32> -> vector<8x1xf32>
    %c0_12 = arith.constant 0 : index
    %c0_13 = arith.constant 0 : index
    %15 = vector.load %arg8[%c0_12, %c0_13] : memref<1x1xf32, #tpu.memory_space<vmem>>, vector<1x1xf32>
    %16 = vector.broadcast %14 : vector<8x1xf32> to vector<8x128xf32>
    %17 = arith.addf %9, %16 : vector<8x128xf32>
    %18 = vector.broadcast %15 : vector<1x1xf32> to vector<8x128xf32>
    %19 = arith.addf %17, %18 : vector<8x128xf32>
    %20 = arith.index_cast %arg0 : i32 to index
    %21 = memref.load %arg2[%20] : memref<2xf32, #tpu.memory_space<smem>>
    %22 = tpu.iota {dimensions = array<i32: 0>} : vector<8x128xi32>
    %23 = tpu.iota {dimensions = array<i32: 1>} : vector<8x128xi32>
    %c1024_i32 = arith.constant 1024 : i32
    %24 = arith.muli %arg1, %c1024_i32 : i32
    %c128_i32 = arith.constant 128 : i32
    %25 = vector.broadcast %c128_i32 : i32 to vector<8x128xi32>
    %26 = arith.muli %22, %25 : vector<8x128xi32>
    %27 = vector.broadcast %24 : i32 to vector<8x128xi32>
    %28 = arith.addi %27, %26 : vector<8x128xi32>
    %29 = arith.addi %28, %23 : vector<8x128xi32>
    %c1_i32 = arith.constant 1 : i32
    %30 = vector.broadcast %c1_i32 : i32 to vector<8x128xi32>
    %31 = arith.addi %29, %30 : vector<8x128xi32>
    %32 = arith.sitofp %31 : vector<8x128xi32> to vector<8x128xf32>
    %33 = vector.broadcast %21 : f32 to vector<8x128xf32>
    %34 = arith.subf %33, %19 : vector<8x128xf32>
    %35 = vector.broadcast %21 : f32 to vector<8x128xf32>
    %36 = arith.addf %35, %32 : vector<8x128xf32>
    %37 = arith.subf %36, %19 : vector<8x128xf32>
    %c0_i32_14 = arith.constant 0 : i32
    %38 = vector.broadcast %c0_i32_14 : i32 to vector<8x128xi32>
    %39 = arith.cmpi eq, %29, %38 : vector<8x128xi32>
    %cst_15 = arith.constant 5.000000e-01 : f32
    %40 = vector.broadcast %cst_15 : f32 to vector<8x128xf32>
    %41 = arith.cmpf ogt, %7, %40 : vector<8x128xf32>
    %42 = arith.ori %39, %41 : vector<8x128xi1>
    %cst_16 = arith.constant 1.000000e+00 : f32
    %43 = vector.broadcast %cst_16 : f32 to vector<8x128xf32>
    %44 = arith.select %42, %43, %34 : vector<8x128xi1>, vector<8x128xf32>
    %cst_17 = arith.constant 1.000000e+00 : f32
    %45 = vector.broadcast %cst_17 : f32 to vector<8x128xf32>
    %46 = arith.subf %37, %45 : vector<8x128xf32>
    %47 = arith.mulf %37, %46 : vector<8x128xf32>
    %48 = arith.select %42, %37, %47 : vector<8x128xi1>, vector<8x128xf32>
    %49 = arith.divf %44, %48 : vector<8x128xf32>
    %cst_18 = arith.constant 0.000000e+00 : f32
    %50 = vector.broadcast %cst_18 : f32 to vector<8x128xf32>
    %51 = arith.cmpf oge, %4, %50 : vector<8x128xf32>
    %cst_19 = arith.constant 0.000000e+00 : f32
    %52 = vector.broadcast %cst_19 : f32 to vector<8x128xf32>
    %53 = arith.select %51, %4, %52 : vector<8x128xi1>, vector<8x128xf32>
    %c0_20 = arith.constant 0 : index
    %c0_21 = arith.constant 0 : index
    %c0_22 = arith.constant 0 : index
    %54 = vector.load %arg7[%c0_20, %c0_21, %c0_22] : memref<1x1x128xf32, #tpu.memory_space<vmem>>, vector<1x1x128xf32>
    %55 = vector.shape_cast %54 : vector<1x1x128xf32> to vector<1x128xf32>
    %56 = arith.mulf %53, %49 : vector<8x128xf32>
    %cst_23 = arith.constant dense<0.000000e+00> : vector<128xf32>
    %57 = vector.multi_reduction <add>, %56, %cst_23 [0] : vector<8x128xf32> to vector<128xf32>
    %58 = vector.shape_cast %57 : vector<128xf32> to vector<1x128xf32>
    %59 = arith.addf %55, %58 : vector<1x128xf32>
    %c0_24 = arith.constant 0 : index
    %c0_25 = arith.constant 0 : index
    %c0_26 = arith.constant 0 : index
    %60 = vector.load %arg7[%c0_24, %c0_25, %c0_26] : memref<1x1x128xf32, #tpu.memory_space<vmem>>, vector<1x1x128xf32>
    %61 = vector.shape_cast %60 : vector<1x1x128xf32> to vector<1x128xf32>
    %62 = vector.shape_cast %59 : vector<1x128xf32> to vector<1x1x128xf32>
    tpu.vector_store %arg7[%c0_24, %c0_25, %c0_26], %62 {strides = array<i32>} : memref<1x1x128xf32, #tpu.memory_space<vmem>>, vector<1x1x128xf32>,
    %cst_27 = arith.constant dense<0.000000e+00> : vector<1xf32>
    %63 = vector.multi_reduction <add>, %11, %cst_27 [0] : vector<8x1xf32> to vector<1xf32>
    %64 = vector.shape_cast %63 : vector<1xf32> to vector<1x1xf32>
    %65 = arith.addf %15, %64 : vector<1x1xf32>
    %c0_28 = arith.constant 0 : index
    %c0_29 = arith.constant 0 : index
    %66 = vector.load %arg8[%c0_28, %c0_29] : memref<1x1xf32, #tpu.memory_space<vmem>>, vector<1x1xf32>
    tpu.vector_store %arg8[%c0_28, %c0_29], %65 {strides = array<i32>} : memref<1x1xf32, #tpu.memory_space<vmem>>, vector<1x1xf32>,
    return
  }
  func.func @transform_0(%arg0: i32, %arg1: i32) -> i32 {
    %c0_i32 = arith.constant 0 : i32
    %c0_i32_0 = arith.constant 0 : i32
    return %c0_i32 : i32
  }
  func.func @transform_1(%arg0: i32, %arg1: i32) -> (i32, i32) {
    %c0_i32 = arith.constant 0 : i32
    %c0_i32_0 = arith.constant 0 : i32
    %c0_i32_1 = arith.constant 0 : i32
    return %c0_i32, %c0_i32_0 : i32, i32
  }
  func.func @transform_2(%arg0: i32, %arg1: i32) -> (i32, i32) {
    %c0_i32 = arith.constant 0 : i32
    %c0_i32_0 = arith.constant 0 : i32
    %c0_i32_1 = arith.constant 0 : i32
    return %c0_i32, %c0_i32_0 : i32, i32
  }
  func.func @transform_3(%arg0: i32, %arg1: i32) -> (i32, i32, i32) {
    %c0_i32 = arith.constant 0 : i32
    %c0_i32_0 = arith.constant 0 : i32
    return %arg0, %arg1, %c0_i32 : i32, i32, i32
  }
  func.func @transform_4(%arg0: i32, %arg1: i32) -> (i32, i32, i32) {
    %c0_i32 = arith.constant 0 : i32
    %c0_i32_0 = arith.constant 0 : i32
    return %arg0, %arg1, %c0_i32 : i32, i32, i32
  }
  func.func @transform_5(%arg0: i32, %arg1: i32) -> (i32, i32, i32) {
    %c0_i32 = arith.constant 0 : i32
    %c0_i32_0 = arith.constant 0 : i32
    %c0_i32_1 = arith.constant 0 : i32
    return %arg0, %c0_i32, %c0_i32_0 : i32, i32, i32
  }
}

</mosaic_0001>

<llo_original>
// kernel: tpu_custom_call.1
$region0: #{tpu_custom_call.1}
  #allocation0 [shape = 'u32[]', space=smem, size = 0x4, offset = 0x4, fixed_abs, tag = 'smem constant byte address 0x4 - core index']
  #allocation1 [shape = 'u32[72,128]{1,0:T(1,128)}', space=vmem, size = 0x9000, scoped, tag = 'internal scratch']
  #allocation2 [shape = 'f32[1,1]{1,0:T(1,128)}', space=vmem, size = 0x200, scoped, tag = 'scratch operand']
  %s0 = inlined_call_operand.hbm [shape: f32[2], index: 0, kind: input, shape index: {}]
  %s1 = inlined_call_operand.hbm [shape: bf16[128,128], index: 1, kind: input, shape index: {}]
  %s2 = inlined_call_operand.hbm [shape: bf16[8,8], index: 2, kind: input, shape index: {}]
  %s3 = inlined_call_operand.hbm [shape: f32[2,8,128], index: 3, kind: input, shape index: {}]
  %s4 = inlined_call_operand.hbm [shape: bf16[2,8,128], index: 4, kind: input, shape index: {}]
  %s5 = inlined_call_operand.hbm [shape: f32[2,1,128], index: 5, kind: output, shape index: {}]
  %s6 = sld [smem:[#allocation0]]
  $region77: #{tpu_custom_call.1} parent=0
    _
  %s8 = ssub.s32 1, %s6
  %s9 = scalar_select 0, %s8, %s6
  $region1: #{tpu_custom_call.1} parent=0
    #allocation3 [shape = 'u8[512]{0}', space=smem, size = 0x200, scoped, tag = 'input window, operand 0, single buffered']
    #allocation4 [shape = 's32[2]{0}', space=sflag, size = 0x8, scoped, tag = 'scoped memory for tpu_custom_call.1']
    #allocation5 [shape = 's32[2]{0}', space=sflag, size = 0x8, scoped, tag = 'scoped memory for tpu_custom_call.1']
    #allocation6 [shape = 's32[2]{0}', space=sflag, size = 0x8, scoped, tag = 'scoped memory for tpu_custom_call.1']
    #allocation7 [shape = 'u8[32768]{0}', space=vmem, size = 0x8000, scoped, tag = 'input window, operand 1, single buffered']
    #allocation8 [shape = 'u8[2048]{0}', space=vmem, size = 0x800, scoped, tag = 'input window, operand 2, single buffered']
    #allocation9 [shape = 's32[1]{0}', space=sflag, size = 0x4, scoped, tag = 'scoped memory for tpu_custom_call.1']
    #allocation10 [shape = 'u8[8192]{0}', space=vmem, size = 0x2000, scoped, tag = 'input window, operand 3']
    #allocation11 [shape = 'u8[4096]{0}', space=vmem, size = 0x1000, scoped, tag = 'input window, operand 4']
    #allocation12 [shape = 'u8[1024]{0}', space=vmem, size = 0x400, scoped, tag = 'output window, operand 0']
    %10 = vsyncpa [#allocation6], 0
    %11 = vsyncpa [#allocation4], 0
    %12 = vsyncpa [#allocation9], 0
    %13 = vsyncpa [#allocation5], 0
    %s14 = scalar_lea.sflag [#allocation5], 1
    %15 = vsyncpa %s14, 0
    loop: start=0, step=1, limit=4
    $region2: #{tpu_custom_call.1} parent=1 // loop_pre_header
      _
    $region3: #{tpu_custom_call.1} parent=1 // loop_header
      %s17 = sphi 0, %s21
      %p18 = scmp.ge.s32.totalorder %s17, 4
      %s24 = sphi 0, %s36
      %s25 = sphi 0, %s32
      %s26 = sphi 0, %s24
      %s27 = sphi 0, %s25
      %s28 = sphi 0, %s26
      %s29 = sphi 0, %s27
      %s37 = sphi 0, %s37
      %s39 = sphi 0, %s37
      %s40 = sphi 0, %s39
      %s54 = sphi 0, %s40
      %s58 = sphi 0, %s58
      %s60 = sphi 0, %s58
      %s61 = sphi 0, %s60
      %s75 = sphi 0, %s61
      %s79 = sphi 0, %s79
      %s81 = sphi 0, %s79
      %s82 = sphi 0, %s81
      %s96 = sphi 0, %s82
      %s104 = sphi 0, %s106
      %s107 = sphi 0, %s104
      %s108 = sphi 0, %s107
      %s124 = sphi 0, %s108
      %s132 = sphi 0, %s134
      %s135 = sphi 0, %s132
      %s136 = sphi 0, %s135
      %s152 = sphi 0, %s136
      %s158 = sphi 0, %s160
      %s161 = sphi 0, %s158
      %s162 = sphi 0, %s161
      %s178 = sphi 0, %s162
    $region4: #{tpu_custom_call.1} parent=1 // loop_header_branch
      %20 = sbr.rel (%p18) target = $region8
    $region5: #{tpu_custom_call.1} parent=1 // loop_body
      %s22 = ssub.s32 %s17, 1
      %s23 = ssub.s32 %s17, 2
      %s30 = sadd.s32 1, %s25
      %p31 = scmp.ge.s32.totalorder %s30, 1
      %s32 = scalar_select %p31, 0, %s30
      %s33 = sadd.s32 1, %s24
      %s34 = scalar_select %p31, %s33, %s24
      %p35 = scmp.ge.s32.totalorder %s34, 2
      %s36 = scalar_select %p35, 0, %s34
      %s38 = sadd.s32 %s37, 1
      %p41 = scmp.eq.s32.totalorder %s17, 1
      %p42 = scmp.ne.s32.totalorder %s37, %s39
      %p43 = scmp.eq.s32.totalorder %s17, 0
      %p44 = por %p42, %p43
      %p45 = scmp.ne.s32.totalorder %s37, %s39
      %p46 = scmp.eq.s32.totalorder %s22, 1
      %p47 = por %p45, %p46
      %p48 = scmp.ne.s32.totalorder %s39, %s40
      %p49 = scmp.eq.s32.totalorder %s22, 0
      %p50 = por %p48, %p49
      %p51 = scmp.ne.s32.totalorder %s39, %s40
      %p52 = scmp.eq.s32.totalorder %s23, 1
      %p53 = por %p51, %p52
      %p55 = scmp.ne.s32.totalorder %s40, %s54
      %p56 = scmp.eq.s32.totalorder %s23, 0
      %p57 = por %p55, %p56
      %s59 = sadd.s32 %s58, 1
      %p62 = scmp.eq.s32.totalorder %s17, 1
      %p63 = scmp.ne.s32.totalorder %s58, %s60
      %p64 = scmp.eq.s32.totalorder %s17, 0
      %p65 = por %p63, %p64
      %p66 = scmp.ne.s32.totalorder %s58, %s60
      %p67 = scmp.eq.s32.totalorder %s22, 1
      %p68 = por %p66, %p67
      %p69 = scmp.ne.s32.totalorder %s60, %s61
      %p70 = scmp.eq.s32.totalorder %s22, 0
      %p71 = por %p69, %p70
      %p72 = scmp.ne.s32.totalorder %s60, %s61
      %p73 = scmp.eq.s32.totalorder %s23, 1
      %p74 = por %p72, %p73
      %p76 = scmp.ne.s32.totalorder %s61, %s75
      %p77 = scmp.eq.s32.totalorder %s23, 0
      %p78 = por %p76, %p77
      %s80 = sadd.s32 %s79, 1
      %p83 = scmp.eq.s32.totalorder %s17, 1
      %p84 = scmp.ne.s32.totalorder %s79, %s81
      %p85 = scmp.eq.s32.totalorder %s17, 0
      %p86 = por %p84, %p85
      %p87 = scmp.ne.s32.totalorder %s79, %s81
      %p88 = scmp.eq.s32.totalorder %s22, 1
      %p89 = por %p87, %p88
      %p90 = scmp.ne.s32.totalorder %s81, %s82
      %p91 = scmp.eq.s32.totalorder %s22, 0
      %p92 = por %p90, %p91
      %p93 = scmp.ne.s32.totalorder %s81, %s82
      %p94 = scmp.eq.s32.totalorder %s23, 1
      %p95 = por %p93, %p94
      %p97 = scmp.ne.s32.totalorder %s82, %s96
      %p98 = scmp.eq.s32.totalorder %s23, 0
      %p99 = por %p97, %p98
      %s100 = ssub.s32 %s24, %s36
      %s101 = ssub.s32 %s25, %s32
      %s102 = sor.u32 %s100, %s101
      %p103 = scmp.eq.s32.totalorder %s102, 0
      %s105 = sadd.s32 %s104, 1
      %s106 = scalar_select %p103, %s104, %s105
      %p109 = pneg %p103
      %p110 = scmp.eq.s32.totalorder %s17, 1
      %p111 = por %p109, %p110
      %p112 = scmp.ne.s32.totalorder %s104, %s107
      %p113 = scmp.eq.s32.totalorder %s17, 0
      %p114 = por %p112, %p113
      %p115 = scmp.ne.s32.totalorder %s104, %s107
      %p116 = scmp.eq.s32.totalorder %s22, 1
      %p117 = por %p115, %p116
      %p118 = scmp.ne.s32.totalorder %s107, %s108
      %p119 = scmp.eq.s32.totalorder %s22, 0
      %p120 = por %p118, %p119
      %p121 = scmp.ne.s32.totalorder %s107, %s108
      %p122 = scmp.eq.s32.totalorder %s23, 1
      %p123 = por %p121, %p122
      %p125 = scmp.ne.s32.totalorder %s108, %s124
      %p126 = scmp.eq.s32.totalorder %s23, 0
      %p127 = por %p125, %p126
      %s128 = ssub.s32 %s24, %s36
      %s129 = ssub.s32 %s25, %s32
      %s130 = sor.u32 %s128, %s129
      %p131 = scmp.eq.s32.totalorder %s130, 0
      %s133 = sadd.s32 %s132, 1
      %s134 = scalar_select %p131, %s132, %s133
      %p137 = pneg %p131
      %p138 = scmp.eq.s32.totalorder %s17, 1
      %p139 = por %p137, %p138
      %p140 = scmp.ne.s32.totalorder %s132, %s135
      %p141 = scmp.eq.s32.totalorder %s17, 0
      %p142 = por %p140, %p141
      %p143 = scmp.ne.s32.totalorder %s132, %s135
      %p144 = scmp.eq.s32.totalorder %s22, 1
      %p145 = por %p143, %p144
      %p146 = scmp.ne.s32.totalorder %s135, %s136
      %p147 = scmp.eq.s32.totalorder %s22, 0
      %p148 = por %p146, %p147
      %p149 = scmp.ne.s32.totalorder %s135, %s136
      %p150 = scmp.eq.s32.totalorder %s23, 1
      %p151 = por %p149, %p150
      %p153 = scmp.ne.s32.totalorder %s136, %s152
      %p154 = scmp.eq.s32.totalorder %s23, 0
      %p155 = por %p153, %p154
      %s156 = ssub.s32 %s24, %s36
      %p157 = scmp.eq.s32.totalorder %s156, 0
      %s159 = sadd.s32 %s158, 1
      %s160 = scalar_select %p157, %s158, %s159
      %p163 = pneg %p157
      %p164 = scmp.eq.s32.totalorder %s17, 1
      %p165 = por %p163, %p164
      %p166 = scmp.ne.s32.totalorder %s158, %s161
      %p167 = scmp.eq.s32.totalorder %s17, 0
      %p168 = por %p166, %p167
      %p169 = scmp.ne.s32.totalorder %s158, %s161
      %p170 = scmp.eq.s32.totalorder %s22, 1
      %p171 = por %p169, %p170
      %p172 = scmp.ne.s32.totalorder %s161, %s162
      %p173 = scmp.eq.s32.totalorder %s22, 0
      %p174 = por %p172, %p173
      %p175 = scmp.ne.s32.totalorder %s161, %s162
      %p176 = scmp.eq.s32.totalorder %s23, 1
      %p177 = por %p175, %p176
      %p179 = scmp.ne.s32.totalorder %s162, %s178
      %p180 = scmp.eq.s32.totalorder %s23, 0
      %p181 = por %p179, %p180
      %p182 = scmp.le.s32.totalorder 1, %s17
      %p183 = scmp.lt.s32.totalorder %s17, 3
      %p184 = pnand %p182, %p183
      %p185 = pneg %p184
      // Predicated region
      $region9: #{tpu_custom_call.1} parent=5 // pred_check
        _
      $region10: #{tpu_custom_call.1} parent=5 // pred_check_branch
        %187 = sbr.rel (%p184) target = $region12
      $region11: #{tpu_custom_call.1} parent=5 // pred_region
        %s188 = ssub.s32 %s17, 1
        // Predicated region
        $region13: #{tpu_custom_call.1} parent=11 // pred_check
          %p189 = pneg %p50
        $region14: #{tpu_custom_call.1} parent=11 // pred_check_branch
          %191 = sbr.rel (%p189) target = $region16
        $region15: #{tpu_custom_call.1} parent=11 // pred_region
          %193 = vsyncadd [#allocation6], 0
          %s195 = sshll.u32 %s0, 4
          %s196 = int_to_ptr.hbm [resolvable:$true] %s195
          %198 = dma.hbm_to_smem %s196, 16, [#allocation3], [#allocation6]
        $region16: #{tpu_custom_call.1} parent=11 // pred_fallthru
          _
        // Predicated region
        $region17: #{tpu_custom_call.1} parent=11 // pred_check
          %p199 = pneg %p71
        $region18: #{tpu_custom_call.1} parent=11 // pred_check_branch
          %201 = sbr.rel (%p199) target = $region20
        $region19: #{tpu_custom_call.1} parent=11 // pred_region
          %203 = vsyncadd [#allocation4], 0
          %s204 = sshll.u32 %s1, 4
          %s205 = int_to_ptr.hbm [resolvable:$true] %s204
          %s206 = sshll.u32 [#allocation7], 4
          %s207 = int_to_ptr.vmem [resolvable:$true] %s206
          %212 = dma.hbm_to_vmem [thread:$0]  %s205, 1024, %s207, [#allocation4], 64, 64, 4
        $region20: #{tpu_custom_call.1} parent=11 // pred_fallthru
          _
        // Predicated region
        $region21: #{tpu_custom_call.1} parent=11 // pred_check
          %p213 = pneg %p92
        $region22: #{tpu_custom_call.1} parent=11 // pred_check_branch
          %215 = sbr.rel (%p213) target = $region24
        $region23: #{tpu_custom_call.1} parent=11 // pred_region
          %217 = vsyncadd [#allocation9], 0
          %s219 = sshll.u32 %s2, 4
          %s220 = int_to_ptr.hbm [resolvable:$true] %s219
          %s221 = sshll.u32 [#allocation8], 4
          %s222 = int_to_ptr.vmem [resolvable:$true] %s221
          %224 = dma.hbm_to_vmem [thread:$0]  %s220, 64, %s222, [#allocation9]
        $region24: #{tpu_custom_call.1} parent=11 // pred_fallthru
          _
      $region12: #{tpu_custom_call.1} parent=5 // pred_fallthru
        _
      %p225 = scmp.lt.s32.totalorder %s17, 2
      // Predicated region
      $region25: #{tpu_custom_call.1} parent=5 // pred_check
        %p226 = pneg %p225
      $region26: #{tpu_custom_call.1} parent=5 // pred_check_branch
        %228 = sbr.rel (%p226) target = $region28
      $region27: #{tpu_custom_call.1} parent=5 // pred_region
        // Predicated region
        $region29: #{tpu_custom_call.1} parent=27 // pred_check
          %p229 = pneg %p114
        $region30: #{tpu_custom_call.1} parent=27 // pred_check_branch
          %231 = sbr.rel (%p229) target = $region32
        $region31: #{tpu_custom_call.1} parent=27 // pred_region
          %s232 = sand.u32 %s17, 1
          %s233 = scalar_lea.sflag [#allocation4], %s232
          %s234 = sand.u32 %s104, 1
          %s235 = smul.addr %s234, 8
          %s236 = scalar_lea.vmem [#allocation10], %s235
          %238 = vsyncadd %s233, 0
          %s239 = sadd.s32 %s25, %s24
          %s240 = smul.addr %s239, 8
          %s241 = scalar_lea.hbm %s3, %s240
          %s243 = sshll.u32 %s241, 4
          %s244 = int_to_ptr.hbm [resolvable:$true] %s243
          %s245 = sshll.u32 %s236, 4
          %s246 = int_to_ptr.vmem [resolvable:$true] %s245
          %248 = dma.hbm_to_vmem [thread:$0]  %s244, 128, %s246, %s233
        $region32: #{tpu_custom_call.1} parent=27 // pred_fallthru
          _
        // Predicated region
        $region33: #{tpu_custom_call.1} parent=27 // pred_check
          %p249 = pneg %p142
        $region34: #{tpu_custom_call.1} parent=27 // pred_check_branch
          %251 = sbr.rel (%p249) target = $region36
        $region35: #{tpu_custom_call.1} parent=27 // pred_region
          %s252 = sand.u32 %s17, 1
          %s253 = scalar_lea.sflag [#allocation4], %s252
          %s254 = sand.u32 %s132, 1
          %s255 = smul.addr %s254, 4
          %s256 = scalar_lea.vmem [#allocation11], %s255
          %258 = vsyncadd %s253, 0
          %s259 = sadd.s32 %s25, %s24
          %s260 = smul.addr %s259, 4
          %s261 = scalar_lea.hbm %s4, %s260
          %s263 = sshll.u32 %s261, 4
          %s264 = int_to_ptr.hbm [resolvable:$true] %s263
          %s265 = sshll.u32 %s256, 4
          %s266 = int_to_ptr.vmem [resolvable:$true] %s265
          %268 = dma.hbm_to_vmem [thread:$0]  %s264, 64, %s266, %s253
        $region36: #{tpu_custom_call.1} parent=27 // pred_fallthru
          _
      $region28: #{tpu_custom_call.1} parent=5 // pred_fallthru
        _
      %p269 = scmp.le.s32.totalorder 1, %s17
      %p270 = scmp.lt.s32.totalorder %s17, 3
      %p271 = pnand %p269, %p270
      %p272 = pneg %p271
      // Predicated region
      $region37: #{tpu_custom_call.1} parent=5 // pred_check
        _
      $region38: #{tpu_custom_call.1} parent=5 // pred_check_branch
        %274 = sbr.rel (%p271) target = $region40
      $region39: #{tpu_custom_call.1} parent=5 // pred_region
        %s275 = ssub.s32 %s17, 1
        // Predicated region
        $region41: #{tpu_custom_call.1} parent=39 // pred_check
          %p276 = pneg %p50
        $region42: #{tpu_custom_call.1} parent=39 // pred_check_branch
          %278 = sbr.rel (%p276) target = $region44
        $region43: #{tpu_custom_call.1} parent=39 // pred_region
          %280 = dma.done [#allocation6], 16
        $region44: #{tpu_custom_call.1} parent=39 // pred_fallthru
          _
        // Predicated region
        $region45: #{tpu_custom_call.1} parent=39 // pred_check
          %p281 = pneg %p71
        $region46: #{tpu_custom_call.1} parent=39 // pred_check_branch
          %283 = sbr.rel (%p281) target = $region48
        $region47: #{tpu_custom_call.1} parent=39 // pred_region
          %285 = dma.done [#allocation4], 1024
        $region48: #{tpu_custom_call.1} parent=39 // pred_fallthru
          _
        // Predicated region
        $region49: #{tpu_custom_call.1} parent=39 // pred_check
          %p286 = pneg %p92
        $region50: #{tpu_custom_call.1} parent=39 // pred_check_branch
          %288 = sbr.rel (%p286) target = $region52
        $region51: #{tpu_custom_call.1} parent=39 // pred_region
          %290 = dma.done [#allocation9], 64
        $region52: #{tpu_custom_call.1} parent=39 // pred_fallthru
          _
        %s291 = sand.u32 %s22, 1
        %s292 = scalar_lea.sflag [#allocation4], %s291
        %s293 = sand.u32 %s107, 1
        %s294 = smul.addr %s293, 8
        %s295 = scalar_lea.vmem [#allocation10], %s294
        // Predicated region
        $region53: #{tpu_custom_call.1} parent=39 // pred_check
          %p296 = pneg %p120
        $region54: #{tpu_custom_call.1} parent=39 // pred_check_branch
          %298 = sbr.rel (%p296) target = $region56
        $region55: #{tpu_custom_call.1} parent=39 // pred_region
          %300 = dma.done %s292, 128
        $region56: #{tpu_custom_call.1} parent=39 // pred_fallthru
          _
        %s301 = sand.u32 %s22, 1
        %s302 = scalar_lea.sflag [#allocation4], %s301
        %s303 = sand.u32 %s135, 1
        %s304 = smul.addr %s303, 4
        %s305 = scalar_lea.vmem [#allocation11], %s304
        // Predicated region
        $region57: #{tpu_custom_call.1} parent=39 // pred_check
          %p306 = pneg %p148
        $region58: #{tpu_custom_call.1} parent=39 // pred_check_branch
          %308 = sbr.rel (%p306) target = $region60
        $region59: #{tpu_custom_call.1} parent=39 // pred_region
          %310 = dma.done %s302, 64
        $region60: #{tpu_custom_call.1} parent=39 // pred_fallthru
          _
        %311 = sfence
        %p312 = pneg %p50
        %p313 = pneg %p47
        %p314 = pneg %p71
        %p315 = pneg %p68
        %p316 = pneg %p92
        %p317 = pneg %p89
        %s318 = sand.u32 %s22, 1
        %s319 = scalar_lea.sflag [#allocation4], %s318
        %s320 = sand.u32 %s107, 1
        %s321 = smul.addr %s320, 8
        %s322 = scalar_lea.vmem [#allocation10], %s321
        %p323 = pneg %p120
        %p324 = pneg %p117
        %s325 = sand.u32 %s22, 1
        %s326 = scalar_lea.sflag [#allocation4], %s325
        %s327 = sand.u32 %s135, 1
        %s328 = smul.addr %s327, 4
        %s329 = scalar_lea.vmem [#allocation11], %s328
        %p330 = pneg %p148
        %p331 = pneg %p145
        %p332 = pneg %p174
        %p333 = pneg %p171
        %s334 = sand.u32 %s161, 1
        %s335 = scalar_lea.sflag [#allocation5], %s334
        %s336 = sand.u32 %s161, 1
        %s337 = scalar_lea.vmem [#allocation12], %s336
        %p339 = scmp.eq.s32.totalorder %s27, 0
        // Predicated region
        $region61: #{tpu_custom_call.1} parent=39 // pred_check
          %p340 = pneg %p339
        $region62: #{tpu_custom_call.1} parent=39 // pred_check_branch
          %342 = sbr.rel (%p340) target = $region64
        $region63: #{tpu_custom_call.1} parent=39 // pred_region
          %343 = vst [vmem:[%s337] sm:$0x1] 0.0
          %vm344 = vcmask 0
          %345 = vst.msk [vmem:[#allocation2] sm:$0x1] %vm344, 0.0
        $region64: #{tpu_custom_call.1} parent=39 // pred_fallthru
          _
        %v346 = vld [vmem:[%s295] sm:$0xff]
        %v347 = vld [vmem:[%s305] sm:$0xf]
        %v348 = vunpack.c.l.bf16 %v347
        %v349 = vld [vmem:[#allocation7] sm:$0xf]
        %v350 = vld [vmem:[#allocation7 + $0x4] sm:$0xf]
        %v351 = vld [vmem:[#allocation7 + $0x8] sm:$0xf]
        %v352 = vld [vmem:[#allocation7 + $0xc] sm:$0xf]
        %v353 = vld [vmem:[#allocation7 + $0x10] sm:$0xf]
        %v354 = vld [vmem:[#allocation7 + $0x14] sm:$0xf]
        %v355 = vld [vmem:[#allocation7 + $0x18] sm:$0xf]
        %v356 = vld [vmem:[#allocation7 + $0x1c] sm:$0xf]
        %v357 = vld [vmem:[#allocation7 + $0x20] sm:$0xf]
        %v358 = vld [vmem:[#allocation7 + $0x24] sm:$0xf]
        %v359 = vld [vmem:[#allocation7 + $0x28] sm:$0xf]
        %v360 = vld [vmem:[#allocation7 + $0x2c] sm:$0xf]
        %v361 = vld [vmem:[#allocation7 + $0x30] sm:$0xf]
        %v362 = vld [vmem:[#allocation7 + $0x34] sm:$0xf]
        %v363 = vld [vmem:[#allocation7 + $0x38] sm:$0xf]
        %v364 = vld [vmem:[#allocation7 + $0x3c] sm:$0xf]
        %365 = vadd.xlane.f32.xlu0 %v348
        %v366 = vpop.xlane.xlu0 %365
        %v367 = vld [vmem:[#allocation8] sm:$0xf]
        %v368 = vpack.c.bf16 %v366, %v366
        %vm369 = vcmask 64512
        %v371 = vsel %vm369, %v367, 0
        %vm373 = vcmask 1043456
        %v375 = vsel %vm373, %v368, 0
        %377 = vmatpush.bf16.msra.mxu0 0
        %378 = vmatpush.bf16.msra.mxu0 0
        %379 = vmatpush.bf16.msra.mxu0 0
        %380 = vmatpush.bf16.msra.mxu0 0
        %381 = vmatpush.bf16.msra.mxu0 0
        %382 = vmatpush.bf16.msra.mxu0 0
        %383 = vmatpush.bf16.msra.mxu0 0
        %384 = vmatpush.bf16.msra.mxu0 %v375
        %385 = vmatmul.bf16.gmra.mxu0 %v371
        %v386 = vpop.f32.mrf.mxu0
        %v387 = vadd.f32 0.0, %v386
        %v388 = vpop.f32.mrf.mxu0
        %389 = vdwg.mxu0
        %v390 = vld [vmem:[#allocation2] sm:$0x1]
        %392 = vset.pattern.permute.xlu0 0
        %393 = vperm.xlu0 %392, %v387
        %v394 = vpop.permute.xlu0 %393
        %v412 = vunpack.c.l.b16 %v349
        %v413 = vunpack.c.l.b16 %v350
        %v414 = vunpack.c.l.b16 %v351
        %v415 = vunpack.c.l.b16 %v352
        %v416 = vunpack.c.l.b16 %v353
        %v417 = vunpack.c.l.b16 %v354
        %v418 = vunpack.c.l.b16 %v355
        %v419 = vunpack.c.l.b16 %v356
        %v420 = vunpack.c.l.b16 %v357
        %v421 = vunpack.c.l.b16 %v358
        %v422 = vunpack.c.l.b16 %v359
        %v423 = vunpack.c.l.b16 %v360
        %v424 = vunpack.c.l.b16 %v361
        %v425 = vunpack.c.l.b16 %v362
        %v426 = vunpack.c.l.b16 %v363
        %v427 = vunpack.c.l.b16 %v364
        %v428 = vpack.c.b16 %v413, %v412
        %v429 = vpack.c.b16 %v415, %v414
        %v430 = vpack.c.b16 %v417, %v416
        %v431 = vpack.c.b16 %v419, %v418
        %v432 = vpack.c.b16 %v421, %v420
        %v433 = vpack.c.b16 %v423, %v422
        %v434 = vpack.c.b16 %v425, %v424
        %v435 = vpack.c.b16 %v427, %v426
        %444 = vmatpush.bf16.msra.mxu0 %v435
        %445 = vmatpush.bf16.msra.mxu0 %v434
        %446 = vmatpush.bf16.msra.mxu0 %v433
        %447 = vmatpush.bf16.msra.mxu0 %v432
        %448 = vmatpush.bf16.msra.mxu0 %v431
        %449 = vmatpush.bf16.msra.mxu0 %v430
        %450 = vmatpush.bf16.msra.mxu0 %v429
        %451 = vmatpush.bf16.msra.mxu0 %v428
        %452 = vmatmul.bf16.gmra.mxu0 %v347
        %v453 = vpop.f32.mrf.mxu0
        %v454 = vadd.f32 %v394, %v453
        %v455 = vpop.f32.mrf.mxu0
        %456 = vdwg.mxu0
        %v458 = vperm.slane %v390, 0
        %459 = vset.pattern.permute.xlu0 0
        %460 = vperm.xlu0 %459, %v458
        %v461 = vpop.permute.xlu0 %460
        %v463 = vadd.f32 %v454, %v461
        %s464 = sld [smem:[#allocation3 + %s26]]
        %v465 = vlaneseq
        %v466 = vshrl.u32 %v465, 7
        %v467 = vlaneseq
        %v468 = vand.u32 %v467, 127
        %s469 = smul.u32 %s27, 1024
        %v470 = vmul.u32 %v466, 128
        %v471 = vstv %s469
        %v472 = vadd.s32 %v471, %v470
        %v473 = vadd.s32 %v472, %v468
        %v474 = vadd.s32 %v473, 1
        %v475 = vcvt.s32.f32 %v474
        %v476 = vstv %s464
        %v477 = vsub.f32 %v476, %v463
        %v478 = vadd.f32 %v476, %v475
        %v479 = vsub.f32 %v478, %v463
        %vm480 = vcmp.eq.s32.totalorder %v473, 0
        %vm481 = vcmp.gt.f32.partialorder %v348, 0.5
        %vm482 = vmor %vm480, %vm481
        %v483 = vsel %vm482, 1.0, %v477
        %v484 = vsub.f32 %v479, 1.0
        %v485 = vmul.f32 %v479, %v484
        %v486 = vsel %vm482, %v479, %v485
        %v487 = vrcp.pop %v486
        %v488 = vmul.f32 %v486, %v487
        %v489 = vsub.f32 1.0, %v488
        %v490 = vmul.f32 %v487, %v489
        %v491 = vadd.f32 %v487, %v490
        %vm492 = vweird.f32 %v486
        %vm493 = vweird.f32 %v487
        %vm494 = vmor %vm492, %vm493
        %v495 = vsel %vm494, %v487, %v491
        %v496 = vand.u32 2147483647, %v486
        %vm497 = vcmp.eq.f32.partialorder %v496, 8.507059e+37
        %v498 = vand.u32 %v486, 2147483648
        %v499 = vor.u32 1.1754944e-38, %v498
        %v500 = vsel %vm497, %v499, %v495
        %v501 = vmul.f32 %v483, %v500
        %vm502 = vcmp.ge.f32.partialorder %v346, 0.0
        %v503 = vsel %vm502, %v346, 0.0
        %v504 = vld [vmem:[%s337] sm:$0x1]
        %v505 = vmul.f32 %v503, %v501
        %v506 = vrot.slane %v505, 4
        %v507 = vadd.f32 %v505, %v506
        %v508 = vrot.slane %v507, 2
        %v509 = vadd.f32 %v507, %v508
        %v510 = vrot.slane %v509, 1
        %v511 = vadd.f32 %v509, %v510
        %v512 = vadd.f32 %v504, %v511
        %513 = vst [vmem:[%s337] sm:$0x1] %v512
        %v514 = vrot.slane %v366, 4
        %v515 = vadd.f32 %v366, %v514
        %v516 = vrot.slane %v515, 2
        %v517 = vadd.f32 %v515, %v516
        %v518 = vrot.slane %v517, 1
        %v519 = vadd.f32 %v517, %v518
        %v520 = vadd.f32 %v390, %v519
        %vm521 = vcmask 0
        %522 = vst.msk [vmem:[#allocation2] sm:$0x1] %vm521, %v520
        %s523 = sand.u32 %s161, 1
        %s524 = scalar_lea.sflag [#allocation5], %s523
        %s525 = sand.u32 %s161, 1
        %s526 = scalar_lea.vmem [#allocation12], %s525
        // Predicated region
        $region65: #{tpu_custom_call.1} parent=39 // pred_check
          %p527 = pneg %p171
        $region66: #{tpu_custom_call.1} parent=39 // pred_check_branch
          %529 = sbr.rel (%p527) target = $region68
        $region67: #{tpu_custom_call.1} parent=39 // pred_region
          %531 = vsyncadd %s524, 0
          %s532 = scalar_lea.hbm %s5, %s26
          %s534 = sshll.u32 %s526, 4
          %s535 = int_to_ptr.vmem [resolvable:$true] %s534
          %s536 = sshll.u32 %s532, 4
          %s537 = int_to_ptr.hbm [resolvable:$true] %s536
          %539 = dma.vmem_to_hbm [thread:$0]  %s535, 16, %s537, %s524
        $region68: #{tpu_custom_call.1} parent=39 // pred_fallthru
          _
      $region40: #{tpu_custom_call.1} parent=5 // pred_fallthru
        _
      %p540 = scmp.le.s32.totalorder 2, %s17
      // Predicated region
      $region69: #{tpu_custom_call.1} parent=5 // pred_check
        %p541 = pneg %p540
      $region70: #{tpu_custom_call.1} parent=5 // pred_check_branch
        %543 = sbr.rel (%p541) target = $region72
      $region71: #{tpu_custom_call.1} parent=5 // pred_region
        %s544 = ssub.s32 %s17, 2
        // Predicated region
        $region73: #{tpu_custom_call.1} parent=71 // pred_check
          %p545 = pneg %p177
        $region74: #{tpu_custom_call.1} parent=71 // pred_check_branch
          %547 = sbr.rel (%p545) target = $region76
        $region75: #{tpu_custom_call.1} parent=71 // pred_region
          %s548 = sand.u32 %s162, 1
          %s549 = scalar_lea.sflag [#allocation5], %s548
          %s550 = sand.u32 %s162, 1
          %s551 = scalar_lea.vmem [#allocation12], %s550
          %553 = dma.done %s549, 16
        $region76: #{tpu_custom_call.1} parent=71 // pred_fallthru
          _
      $region72: #{tpu_custom_call.1} parent=5 // pred_fallthru
        _
    $region6: #{tpu_custom_call.1} parent=1 // loop_footer
      %s21 = sadd.s32 1, %s17
    $region7: #{tpu_custom_call.1} parent=1 // loop_footer_branch
      %16 = sbr.rel target = $region3
    $region8: #{tpu_custom_call.1} parent=1 // loop_exit
      _
    %554 = vsyncpa [#allocation4], 1
    %s555 = scalar_lea.sflag [#allocation4], 1
    %556 = vsyncpa %s555, 1
    %557 = vsyncpa [#allocation9], 1
    %558 = vsyncpa [#allocation5], 1
    %s559 = scalar_lea.sflag [#allocation5], 1
    %560 = vsyncpa %s559, 1
    %561 = vsyncpa [#allocation6], 1
    %s562 = scalar_lea.sflag [#allocation6], 1
    %563 = vsyncpa %s562, 1

</llo_original>
